<compile_context>
chip_gen: v5e
topology: v5e:2x2
jax: 0.10.0
libtpu: 0.0.40
codegen_flags: <defaults>
</compile_context>

<pallas_src>
import jax
import jax.numpy as jnp
from jax import lax
from jax.experimental import pallas as pl
from jax.experimental.pallas import tpu as pltpu

K = 7          # conv kernel size
PAD = 3        # conv padding


def _model_kernel(x_unf_ref, w1_ref, b1_ref, w2_ref, b2_ref, wfct_ref, bfc_ref,
                  o_ref, h1p_ref):
    """Single invocation; batch folded into the matmul M dimension.

    x_unf_ref : (B*L, K*C_in)     conv1 im2col slab (built in the wrapper)
    w1_ref    : (K*C_in, C1)      conv1 weights, tap-major flattened
    b1_ref    : (1, C1)
    w2_ref    : (K*C1, C2)        conv2 weights, tap-major flattened
    b2_ref    : (1, C2)
    wfct_ref  : (1, C2)           final linear weight (transposed)
    bfc_ref   : (1, 1)
    o_ref     : (1, B*L)          lane-dense sigmoid output
    h1p_ref   : (B, L+2*PAD, C1)  VMEM scratch: zero-padded hidden activations
    """
    B, Lp, C1 = h1p_ref.shape
    L = Lp - 2 * PAD
    M = B * L

    # ---- conv1: one im2col matmul (contraction depth K*C_in) + bias + ReLU ----
    h1 = jnp.dot(x_unf_ref[...], w1_ref[...],
                 preferred_element_type=jnp.float32)              # (M, C1)
    h1 = jnp.maximum(h1 + b1_ref[...], 0.0)

    # ---- stage h1 into a zero-padded VMEM scratch (no in-kernel concat re-pad) ----
    # One full unmasked store to clear the padding, then a single interior write.
    h1p_ref[...] = jnp.zeros((B, Lp, C1), jnp.float32)
    h1p_ref[:, PAD:PAD + L, :] = h1.reshape(B, L, C1)

    # ---- conv2: in-kernel im2col (contraction depth K*C1) + bias + ReLU ----
    h1_unf = jnp.concatenate(
        [h1p_ref[:, k:k + L, :] for k in range(K)], axis=-1
    ).reshape(M, K * C1)                                          # (M, K*C1)
    h2 = jnp.dot(h1_unf, w2_ref[...], preferred_element_type=jnp.float32)
    h2 = jnp.maximum(h2 + b2_ref[...], 0.0)                       # (M, C2)

    # ---- final linear + sigmoid, emitted lane-dense as (1, M) ----
    logits = lax.dot_general(wfct_ref[...], h2,
                             dimension_numbers=(((1,), (1,)), ((), ())),
                             preferred_element_type=jnp.float32)  # (1, M)
    o_ref[...] = jax.nn.sigmoid(logits + bfc_ref[...]).astype(o_ref.dtype)


def model_forward(x, params):
    """x: (B, L, C_in) float32.  Returns (B, L, 1) float32."""
    w1, b1, w2, b2, wfc, bfc = params     # w1: (K, C_in, C1), w2: (K, C1, C2)
    B, L, c_in = x.shape
    c1 = w1.shape[2]
    c2 = w2.shape[2]

    # --- JAX-side layout plumbing: pad + im2col unfold of the input ---
    xp = jnp.pad(x, ((0, 0), (PAD, PAD), (0, 0)))                     # (B, L+6, C_in)
    x_unf = jnp.concatenate([xp[:, k:k + L, :] for k in range(K)], axis=-1)
    x_unf = x_unf.reshape(B * L, K * c_in)                            # (B*L, K*C_in)

    w1_flat = w1.reshape(K * c_in, c1)                                # (K*C_in, C1)
    w2_flat = w2.reshape(K * c1, c2)                                  # (K*C1, C2)
    wfc_t = wfc.reshape(c2, 1).T                                      # (1, C2)
    b1_r = b1.reshape(1, c1)
    b2_r = b2.reshape(1, c2)
    bfc_r = bfc.reshape(1, 1)

    flops = 2 * B * L * (K * c_in * c1 + K * c1 * c2 + c2)
    bytes_accessed = 4 * (x_unf.size + w1_flat.size + w2_flat.size +
                          wfc_t.size + c1 + c2 + 1 + B * L)
    cost = pl.CostEstimate(flops=flops, transcendentals=B * L,
                           bytes_accessed=bytes_accessed)

    vmem = pl.BlockSpec(memory_space=pltpu.MemorySpace.VMEM)

    out = pl.pallas_call(
        _model_kernel,
        out_shape=jax.ShapeDtypeStruct((1, B * L), jnp.float32),
        in_specs=[vmem] * 7,
        out_specs=vmem,
        scratch_shapes=[pltpu.VMEM((B, L + 2 * PAD, c1), jnp.float32)],
        cost_estimate=cost,
    )(x_unf, w1_flat, b1_r, w2_flat, b2_r, wfc_t, bfc_r)

    return out.reshape(B, L, 1)


def reference_forward(x, params):
    """Pure-JAX reference (same math as the PyTorch module)."""
    w1, b1, w2, b2, wfc, bfc = params
    B, L, _ = x.shape

    def conv(h, w, b):  # h: (B, L, Cin), w: (K, Cin, Cout)
        hp = jnp.pad(h, ((0, 0), (PAD, PAD), (0, 0)))
        out = sum(jnp.einsum("blc,cd->bld", hp[:, k:k + L, :], w[k])
                  for k in range(K))
        return out + b

    h1 = jax.nn.relu(conv(x, w1, b1))
    h2 = jax.nn.relu(conv(h1, w2, b2))
    return jax.nn.sigmoid(jnp.einsum("blc,co->blo", h2, wfc.reshape(-1, 1)) + bfc)


if __name__ == "__main__":
    # config: embedding[1] = 9 -> C_in = 9 + 7 = 16 ; channel_size = 32 -> C2 = 16
    B, L = 2, 16
    c_in, c1 = 16, 32
    c2 = c1 // 2

    key = jax.random.PRNGKey(0)
    ks = jax.random.split(key, 8)
    x = jax.random.normal(ks[0], (B, L, c_in), jnp.float32)

    # Weights generated in the PyTorch layouts, then converted:
    #   Conv1d weight (C_out, C_in, K)  -> tap-major (K, C_in, C_out)
    #   Linear weight (1, C2)           -> (C2, 1)
    w1_pt = jax.random.normal(ks[1], (c1, c_in, K), jnp.float32) * 0.1
    w2_pt = jax.random.normal(ks[3], (c2, c1, K), jnp.float32) * 0.1
    wfc_pt = jax.random.normal(ks[5], (1, c2), jnp.float32) * 0.1

    w1 = jnp.transpose(w1_pt, (2, 1, 0))     # (K, C_in, C1)
    w2 = jnp.transpose(w2_pt, (2, 1, 0))     # (K, C1, C2)
    wfc = wfc_pt.T                            # (C2, 1)
    b1 = jax.random.normal(ks[2], (c1,), jnp.float32) * 0.1
    b2 = jax.random.normal(ks[4], (c2,), jnp.float32) * 0.1
    bfc = jax.random.normal(ks[6], (1,), jnp.float32) * 0.1
    params = (w1, b1, w2, b2, wfc, bfc)

    out = jax.jit(model_forward)(x, params)
    out = jax.block_until_ready(out)

    ref = reference_forward(x, params)
    assert out.shape == (B, L, 1)
    assert jnp.allclose(out, ref, atol=1e-4, rtol=1e-4), "mismatch vs reference"

    print("KERNEL_OK")
</pallas_src>

<mosaic_0001>
module attributes {stable_mosaic.version = 11 : i64} {
  func.func @_model_kernel(%arg0: memref<32x112xf32, #tpu.memory_space<vmem>>, %arg1: memref<112x32xf32, #tpu.memory_space<vmem>>, %arg2: memref<1x32xf32, #tpu.memory_space<vmem>>, %arg3: memref<224x16xf32, #tpu.memory_space<vmem>>, %arg4: memref<1x16xf32, #tpu.memory_space<vmem>>, %arg5: memref<1x16xf32, #tpu.memory_space<vmem>>, %arg6: memref<1x1xf32, #tpu.memory_space<vmem>>, %arg7: memref<1x32xf32, #tpu.memory_space<vmem>>, %arg8: memref<2x22x32xf32, #tpu.memory_space<vmem>>) attributes {dimension_semantics = [], scalar_prefetch = 0 : i64, scratch_operands = 1 : i64, tpu.core_type = #tpu.core_type<tc>} {
    %c0 = arith.constant 0 : index
    %c0_0 = arith.constant 0 : index
    %0 = vector.load %arg0[%c0, %c0_0] : memref<32x112xf32, #tpu.memory_space<vmem>>, vector<32x112xf32>
    %c0_1 = arith.constant 0 : index
    %c0_2 = arith.constant 0 : index
    %1 = vector.load %arg1[%c0_1, %c0_2] : memref<112x32xf32, #tpu.memory_space<vmem>>, vector<112x32xf32>
    %cst = arith.constant dense<0.000000e+00> : vector<32x32xf32>
    %2 = tpu.matmul %0, %1, %cst {dimension_numbers = #tpu.dot_dimension_numbers<[1], [0], [0], [1], [0, 0, 1, 1], [], []>} : vector<32x112xf32>, vector<112x32xf32>, vector<32x32xf32> -> vector<32x32xf32>
    %c0_3 = arith.constant 0 : index
    %c0_4 = arith.constant 0 : index
    %3 = vector.load %arg2[%c0_3, %c0_4] : memref<1x32xf32, #tpu.memory_space<vmem>>, vector<1x32xf32>
    %4 = vector.broadcast %3 : vector<1x32xf32> to vector<32x32xf32>
    %5 = arith.addf %2, %4 : vector<32x32xf32>
    %cst_5 = arith.constant 0.000000e+00 : f32
    %6 = vector.broadcast %cst_5 : f32 to vector<32x32xf32>
    %7 = arith.maximumf %5, %6 : vector<32x32xf32>
    %cst_6 = arith.constant 0.000000e+00 : f32
    %8 = vector.broadcast %cst_6 : f32 to vector<2x22x32xf32>
    %c0_7 = arith.constant 0 : index
    %c0_8 = arith.constant 0 : index
    %c0_9 = arith.constant 0 : index
    %9 = vector.load %arg8[%c0_7, %c0_8, %c0_9] : memref<2x22x32xf32, #tpu.memory_space<vmem>>, vector<2x22x32xf32>
    tpu.vector_store %arg8[%c0_7, %c0_8, %c0_9], %8 {strides = array<i32>} : memref<2x22x32xf32, #tpu.memory_space<vmem>>, vector<2x22x32xf32>,
    %10 = vector.shape_cast %7 : vector<32x32xf32> to vector<2x16x32xf32>
    %c0_10 = arith.constant 0 : index
    %c3 = arith.constant 3 : index
    %c0_11 = arith.constant 0 : index
    %11 = vector.load %arg8[%c0_10, %c3, %c0_11] : memref<2x22x32xf32, #tpu.memory_space<vmem>>, vector<2x16x32xf32>
    tpu.vector_store %arg8[%c0_10, %c3, %c0_11], %10 {strides = array<i32>} : memref<2x22x32xf32, #tpu.memory_space<vmem>>, vector<2x16x32xf32>,
    %c0_12 = arith.constant 0 : index
    %c0_13 = arith.constant 0 : index
    %c0_14 = arith.constant 0 : index
    %12 = vector.load %arg8[%c0_12, %c0_13, %c0_14] : memref<2x22x32xf32, #tpu.memory_space<vmem>>, vector<2x16x32xf32>
    %c0_15 = arith.constant 0 : index
    %c1 = arith.constant 1 : index
    %c0_16 = arith.constant 0 : index
    %13 = vector.load %arg8[%c0_15, %c1, %c0_16] : memref<2x22x32xf32, #tpu.memory_space<vmem>>, vector<2x16x32xf32>
    %c0_17 = arith.constant 0 : index
    %c2 = arith.constant 2 : index
    %c0_18 = arith.constant 0 : index
    %14 = vector.load %arg8[%c0_17, %c2, %c0_18] : memref<2x22x32xf32, #tpu.memory_space<vmem>>, vector<2x16x32xf32>
    %c0_19 = arith.constant 0 : index
    %c3_20 = arith.constant 3 : index
    %c0_21 = arith.constant 0 : index
    %15 = vector.load %arg8[%c0_19, %c3_20, %c0_21] : memref<2x22x32xf32, #tpu.memory_space<vmem>>, vector<2x16x32xf32>
    %c0_22 = arith.constant 0 : index
    %c4 = arith.constant 4 : index
    %c0_23 = arith.constant 0 : index
    %16 = vector.load %arg8[%c0_22, %c4, %c0_23] : memref<2x22x32xf32, #tpu.memory_space<vmem>>, vector<2x16x32xf32>
    %c0_24 = arith.constant 0 : index
    %c5 = arith.constant 5 : index
    %c0_25 = arith.constant 0 : index
    %17 = vector.load %arg8[%c0_24, %c5, %c0_25] : memref<2x22x32xf32, #tpu.memory_space<vmem>>, vector<2x16x32xf32>
    %c0_26 = arith.constant 0 : index
    %c6 = arith.constant 6 : index
    %c0_27 = arith.constant 0 : index
    %18 = vector.load %arg8[%c0_26, %c6, %c0_27] : memref<2x22x32xf32, #tpu.memory_space<vmem>>, vector<2x16x32xf32>
    %19 = tpu.concatenate %12, %13, %14, %15, %16, %17, %18 in 2 : vector<2x16x32xf32>, vector<2x16x32xf32>, vector<2x16x32xf32>, vector<2x16x32xf32>, vector<2x16x32xf32>, vector<2x16x32xf32>, vector<2x16x32xf32> -> vector<2x16x224xf32>
    %20 = vector.shape_cast %19 : vector<2x16x224xf32> to vector<32x224xf32>
    %c0_28 = arith.constant 0 : index
    %c0_29 = arith.constant 0 : index
    %21 = vector.load %arg3[%c0_28, %c0_29] : memref<224x16xf32, #tpu.memory_space<vmem>>, vector<224x16xf32>
    %cst_30 = arith.constant dense<0.000000e+00> : vector<32x16xf32>
    %22 = tpu.matmul %20, %21, %cst_30 {dimension_numbers = #tpu.dot_dimension_numbers<[1], [0], [0], [1], [0, 0, 1, 1], [], []>} : vector<32x224xf32>, vector<224x16xf32>, vector<32x16xf32> -> vector<32x16xf32>
    %c0_31 = arith.constant 0 : index
    %c0_32 = arith.constant 0 : index
    %23 = vector.load %arg4[%c0_31, %c0_32] : memref<1x16xf32, #tpu.memory_space<vmem>>, vector<1x16xf32>
    %24 = vector.broadcast %23 : vector<1x16xf32> to vector<32x16xf32>
    %25 = arith.addf %22, %24 : vector<32x16xf32>
    %cst_33 = arith.constant 0.000000e+00 : f32
    %26 = vector.broadcast %cst_33 : f32 to vector<32x16xf32>
    %27 = arith.maximumf %25, %26 : vector<32x16xf32>
    %c0_34 = arith.constant 0 : index
    %c0_35 = arith.constant 0 : index
    %28 = vector.load %arg5[%c0_34, %c0_35] : memref<1x16xf32, #tpu.memory_space<vmem>>, vector<1x16xf32>
    %cst_36 = arith.constant dense<0.000000e+00> : vector<1x32xf32>
    %29 = tpu.matmul %28, %27, %cst_36 {dimension_numbers = #tpu.dot_dimension_numbers<[1], [1], [0], [0], [0, 0, 1, 0], [], []>} : vector<1x16xf32>, vector<32x16xf32>, vector<1x32xf32> -> vector<1x32xf32>
    %c0_37 = arith.constant 0 : index
    %c0_38 = arith.constant 0 : index
    %30 = vector.load %arg6[%c0_37, %c0_38] : memref<1x1xf32, #tpu.memory_space<vmem>>, vector<1x1xf32>
    %31 = vector.broadcast %30 : vector<1x1xf32> to vector<1x32xf32>
    %32 = arith.addf %29, %31 : vector<1x32xf32>
    %33 = arith.negf %32 : vector<1x32xf32>
    %34 = math.exp %33 : vector<1x32xf32>
    %cst_39 = arith.constant 1.000000e+00 : f32
    %35 = vector.broadcast %cst_39 : f32 to vector<1x32xf32>
    %36 = arith.addf %35, %34 : vector<1x32xf32>
    %37 = arith.divf %35, %36 : vector<1x32xf32>
    %c0_40 = arith.constant 0 : index
    %c0_41 = arith.constant 0 : index
    %38 = vector.load %arg7[%c0_40, %c0_41] : memref<1x32xf32, #tpu.memory_space<vmem>>, vector<1x32xf32>
    tpu.vector_store %arg7[%c0_40, %c0_41], %37 {strides = array<i32>} : memref<1x32xf32, #tpu.memory_space<vmem>>, vector<1x32xf32>,
    return
  }
}

</mosaic_0001>

<llo_original>
// kernel: model_forward.1
$region0: #{model_forward.1}
  #allocation0 [shape = 'u32[]', space=smem, size = 0x4, offset = 0x4, fixed_abs, tag = 'smem constant byte address 0x4 - core index']
  #allocation1 [shape = 'u32[72,128]{1,0:T(1,128)}', space=vmem, size = 0x9000, scoped, tag = 'internal scratch']
  #allocation2 [shape = 'f32[2,22,32]{2,1,0:T(8,128)}', space=vmem, size = 0x6000, scoped, tag = 'scratch operand']
  #allocation3 [shape = 'f32[1,1]{1,0:T(1,128)S(1)}', space=vmem, size = 0x200, scoped, tag = 'scoped memory for model_forward.1']
  %s0 = inlined_call_operand.vmem [shape: f32[32,112], index: 0, kind: input, shape index: {}]
  %s1 = inlined_call_operand.vmem [shape: f32[112,32], index: 1, kind: input, shape index: {}]
  %s2 = inlined_call_operand.vmem [shape: f32[1,32], index: 2, kind: input, shape index: {}]
  %s3 = inlined_call_operand.vmem [shape: f32[224,16], index: 3, kind: input, shape index: {}]
  %s4 = inlined_call_operand.vmem [shape: f32[1,16], index: 4, kind: input, shape index: {}]
  %s5 = inlined_call_operand.vmem [shape: f32[1,16], index: 5, kind: input, shape index: {}]
  %s6 = inlined_call_operand.<no memory space> [shape: f32[1,1], index: 6, kind: input, shape index: {}]
  %s7 = inlined_call_operand.vmem [shape: f32[1,32], index: 7, kind: output, shape index: {}]
  %s8 = sld [smem:[#allocation0]]
  $region38: #{model_forward.1} parent=0
    _
  %s10 = ssub.s32 1, %s8
  %s11 = scalar_select 0, %s10, %s8
  %v12 = vstv %s6
  %13 = vst [vmem:[#allocation3] sm:$0x1] %v12
  // Predicated region
  $region2: #{model_forward.1} parent=0 // pred_check
    _
  $region3: #{model_forward.1} parent=0 // pred_check_branch
    %15 = sbr.rel (0) target = $region5
  $region4: #{model_forward.1} parent=0 // pred_region
    _
  $region5: #{model_forward.1} parent=0 // pred_fallthru
    _
  // Predicated region
  $region6: #{model_forward.1} parent=0 // pred_check
    _
  $region7: #{model_forward.1} parent=0 // pred_check_branch
    %17 = sbr.rel (0) target = $region9
  $region8: #{model_forward.1} parent=0 // pred_region
    _
  $region9: #{model_forward.1} parent=0 // pred_fallthru
    _
  // Predicated region
  $region10: #{model_forward.1} parent=0 // pred_check
    _
  $region11: #{model_forward.1} parent=0 // pred_check_branch
    %19 = sbr.rel (0) target = $region13
  $region12: #{model_forward.1} parent=0 // pred_region
    _
  $region13: #{model_forward.1} parent=0 // pred_fallthru
    _
  // Predicated region
  $region14: #{model_forward.1} parent=0 // pred_check
    _
  $region15: #{model_forward.1} parent=0 // pred_check_branch
    %21 = sbr.rel (0) target = $region17
  $region16: #{model_forward.1} parent=0 // pred_region
    _
  $region17: #{model_forward.1} parent=0 // pred_fallthru
    _
  // Predicated region
  $region18: #{model_forward.1} parent=0 // pred_check
    _
  $region19: #{model_forward.1} parent=0 // pred_check_branch
    %23 = sbr.rel (0) target = $region21
  $region20: #{model_forward.1} parent=0 // pred_region
    _
  $region21: #{model_forward.1} parent=0 // pred_fallthru
    _
  // Predicated region
  $region22: #{model_forward.1} parent=0 // pred_check
    _
  $region23: #{model_forward.1} parent=0 // pred_check_branch
    %25 = sbr.rel (0) target = $region25
  $region24: #{model_forward.1} parent=0 // pred_region
    _
  $region25: #{model_forward.1} parent=0 // pred_fallthru
    _
  // Predicated region
  $region26: #{model_forward.1} parent=0 // pred_check
    _
  $region27: #{model_forward.1} parent=0 // pred_check_branch
    %27 = sbr.rel (0) target = $region29
  $region28: #{model_forward.1} parent=0 // pred_region
    _
  $region29: #{model_forward.1} parent=0 // pred_fallthru
    _
  %v28 = vld [vmem:[%s0] sm:$0xff]
  %v29 = vld [vmem:[%s0 + $0x8] sm:$0xff]
  %v30 = vld [vmem:[%s0 + $0x10] sm:$0xff]
  %v31 = vld [vmem:[%s0 + $0x18] sm:$0xff]
  %v32 = vld [vmem:[%s1] sm:$0xff]
  %v33 = vld [vmem:[%s1 + $0x8] sm:$0xff]
  %v34 = vld [vmem:[%s1 + $0x10] sm:$0xff]
  %v35 = vld [vmem:[%s1 + $0x18] sm:$0xff]
  %v36 = vld [vmem:[%s1 + $0x20] sm:$0xff]
  %v37 = vld [vmem:[%s1 + $0x28] sm:$0xff]
  %v38 = vld [vmem:[%s1 + $0x30] sm:$0xff]
  %v39 = vld [vmem:[%s1 + $0x38] sm:$0xff]
  %v40 = vld [vmem:[%s1 + $0x40] sm:$0xff]
  %v41 = vld [vmem:[%s1 + $0x48] sm:$0xff]
  %v42 = vld [vmem:[%s1 + $0x50] sm:$0xff]
  %v43 = vld [vmem:[%s1 + $0x58] sm:$0xff]
  %v44 = vld [vmem:[%s1 + $0x60] sm:$0xff]
  %v45 = vld [vmem:[%s1 + $0x68] sm:$0xff]
  %v46 = vld [vmem:[%s2] sm:$0x1]
  %v48 = vperm.slane %v46, 0
  %vm50 = vcmask 916480
  %v52 = vsel %vm50, %v28, 0
  %v55 = vsel %vm50, %v29, 0
  %v58 = vsel %vm50, %v30, 0
  %v61 = vsel %vm50, %v31, 0
  %63 = vmatpush.msra.mxu0 0.0
  %64 = vmatpush.msra.mxu0 0.0
  %65 = vmatpush.msra.mxu0 %v45
  %66 = vmatpush.msra.mxu0 %v44
  %67 = vmatpush.msra.mxu0 %v43
  %68 = vmatpush.msra.mxu0 %v42
  %69 = vmatpush.msra.mxu0 %v41
  %70 = vmatpush.msra.mxu0 %v40
  %71 = vmatpush.msra.mxu0 %v39
  %72 = vmatpush.msra.mxu0 %v38
  %73 = vmatpush.msra.mxu0 %v37
  %74 = vmatpush.msra.mxu0 %v36
  %75 = vmatpush.msra.mxu0 %v35
  %76 = vmatpush.msra.mxu0 %v34
  %77 = vmatpush.msra.mxu0 %v33
  %78 = vmatpush.msra.mxu0 %v32
  %79 = vmatmul.f32.gmra.mxu0 %v52
  %v80 = vpop.f32.mrf.mxu0
  %v81 = vadd.f32 %v48, %v80
  %82 = vmatmul.f32.gmra.mxu0 %v55
  %v83 = vpop.f32.mrf.mxu0
  %v84 = vadd.f32 %v48, %v83
  %85 = vmatmul.f32.gmra.mxu0 %v58
  %v86 = vpop.f32.mrf.mxu0
  %v87 = vadd.f32 %v48, %v86
  %88 = vmatmul.f32.gmra.mxu0 %v61
  %v89 = vpop.f32.mrf.mxu0
  %v90 = vadd.f32 %v48, %v89
  %91 = vdwg.mxu0
  %v92 = vmax.f32 %v81, 0.0
  %v93 = vmax.f32 %v84, 0.0
  %v94 = vmax.f32 %v87, 0.0
  %v95 = vmax.f32 %v90, 0.0
  %vm96 = vcmask 261120
  %97 = vst.msk [vmem:[#allocation2] sm:$0xff] %vm96, 0.0
  %98 = vst.msk [vmem:[#allocation2 + $0x8] sm:$0xff] %vm96, 0.0
  %vm99 = vcmask 259072
  %100 = vst.msk [vmem:[#allocation2 + $0x10] sm:$0x3f] %vm99, 0.0
  %101 = vst.msk [vmem:[#allocation2 + $0x18] sm:$0xff] %vm96, 0.0
  %102 = vst.msk [vmem:[#allocation2 + $0x20] sm:$0xff] %vm96, 0.0
  %103 = vst.msk [vmem:[#allocation2 + $0x28] sm:$0x3f] %vm99, 0.0
  %104 = vst.msk [vmem:[#allocation2 + $0x3] sm:$0xff] %vm96, %v92
  %105 = vst.msk [vmem:[#allocation2 + $0xb] sm:$0xff] %vm96, %v93
  %106 = vst.msk [vmem:[#allocation2 + $0x1b] sm:$0xff] %vm96, %v94
  %107 = vst.msk [vmem:[#allocation2 + $0x23] sm:$0xff] %vm96, %v95
  %v108 = vld [vmem:[#allocation2] sm:$0xff]
  %v109 = vld [vmem:[#allocation2 + $0x8] sm:$0xff]
  %v110 = vld [vmem:[#allocation2 + $0x18] sm:$0xff]
  %v111 = vld [vmem:[#allocation2 + $0x20] sm:$0xff]
  %v112 = vld [vmem:[#allocation2 + $0x1] sm:$0xff]
  %v113 = vld [vmem:[#allocation2 + $0x9] sm:$0xff]
  %v114 = vld [vmem:[#allocation2 + $0x19] sm:$0xff]
  %v115 = vld [vmem:[#allocation2 + $0x21] sm:$0xff]
  %v116 = vld [vmem:[#allocation2 + $0x2] sm:$0xff]
  %v117 = vld [vmem:[#allocation2 + $0xa] sm:$0xff]
  %v118 = vld [vmem:[#allocation2 + $0x1a] sm:$0xff]
  %v119 = vld [vmem:[#allocation2 + $0x22] sm:$0xff]
  %v120 = vld [vmem:[#allocation2 + $0x3] sm:$0xff]
  %v121 = vld [vmem:[#allocation2 + $0xb] sm:$0xff]
  %v122 = vld [vmem:[#allocation2 + $0x1b] sm:$0xff]
  %v123 = vld [vmem:[#allocation2 + $0x23] sm:$0xff]
  %v124 = vld [vmem:[#allocation2 + $0x4] sm:$0xff]
  %v125 = vld [vmem:[#allocation2 + $0xc] sm:$0xff]
  %v126 = vld [vmem:[#allocation2 + $0x1c] sm:$0xff]
  %v127 = vld [vmem:[#allocation2 + $0x24] sm:$0xff]
  %v128 = vld [vmem:[#allocation2 + $0x5] sm:$0xff]
  %v129 = vld [vmem:[#allocation2 + $0xd] sm:$0xff]
  %v130 = vld [vmem:[#allocation2 + $0x1d] sm:$0xff]
  %v131 = vld [vmem:[#allocation2 + $0x25] sm:$0xff]
  %v132 = vld [vmem:[#allocation2 + $0x6] sm:$0xff]
  %v133 = vld [vmem:[#allocation2 + $0xe] sm:$0xff]
  %v134 = vld [vmem:[#allocation2 + $0x1e] sm:$0xff]
  %v135 = vld [vmem:[#allocation2 + $0x26] sm:$0xff]
  %140 = vrot.lane.b32.xlu0 %v112, 32
  %v141 = vpop.permute.xlu0 %140
  %142 = vrot.lane.b32.xlu0 %v113, 32
  %v143 = vpop.permute.xlu0 %142
  %144 = vrot.lane.b32.xlu0 %v114, 32
  %v145 = vpop.permute.xlu0 %144
  %146 = vrot.lane.b32.xlu0 %v115, 32
  %v147 = vpop.permute.xlu0 %146
  %156 = vrot.lane.b32.xlu0 %v116, 64
  %v157 = vpop.permute.xlu0 %156
  %158 = vrot.lane.b32.xlu0 %v117, 64
  %v159 = vpop.permute.xlu0 %158
  %160 = vrot.lane.b32.xlu0 %v118, 64
  %v161 = vpop.permute.xlu0 %160
  %162 = vrot.lane.b32.xlu0 %v119, 64
  %v163 = vpop.permute.xlu0 %162
  %172 = vrot.lane.b32.xlu0 %v120, 96
  %v173 = vpop.permute.xlu0 %172
  %174 = vrot.lane.b32.xlu0 %v121, 96
  %v175 = vpop.permute.xlu0 %174
  %176 = vrot.lane.b32.xlu0 %v122, 96
  %v177 = vpop.permute.xlu0 %176
  %178 = vrot.lane.b32.xlu0 %v123, 96
  %v179 = vpop.permute.xlu0 %178
  %188 = vrot.lane.b32.xlu0 %v128, 32
  %v189 = vpop.permute.xlu0 %188
  %190 = vrot.lane.b32.xlu0 %v129, 32
  %v191 = vpop.permute.xlu0 %190
  %192 = vrot.lane.b32.xlu0 %v130, 32
  %v193 = vpop.permute.xlu0 %192
  %194 = vrot.lane.b32.xlu0 %v131, 32
  %v195 = vpop.permute.xlu0 %194
  %204 = vrot.lane.b32.xlu0 %v132, 64
  %v205 = vpop.permute.xlu0 %204
  %206 = vrot.lane.b32.xlu0 %v133, 64
  %v207 = vpop.permute.xlu0 %206
  %208 = vrot.lane.b32.xlu0 %v134, 64
  %v209 = vpop.permute.xlu0 %208
  %210 = vrot.lane.b32.xlu0 %v135, 64
  %v211 = vpop.permute.xlu0 %210
  %v216 = vsel %vm96, %v108, %v141
  %v217 = vsel %vm96, %v109, %v143
  %v218 = vsel %vm96, %v110, %v145
  %v219 = vsel %vm96, %v111, %v147
  %vm220 = vcmask 523264
  %v221 = vsel %vm220, %v216, %v157
  %v222 = vsel %vm220, %v217, %v159
  %v223 = vsel %vm220, %v218, %v161
  %v224 = vsel %vm220, %v219, %v163
  %vm225 = vcmask 785408
  %v226 = vsel %vm225, %v221, %v173
  %v227 = vsel %vm225, %v222, %v175
  %v228 = vsel %vm225, %v223, %v177
  %v229 = vsel %vm225, %v224, %v179
  %v230 = vsel %vm96, %v124, %v189
  %v231 = vsel %vm96, %v125, %v191
  %v232 = vsel %vm96, %v126, %v193
  %v233 = vsel %vm96, %v127, %v195
  %v234 = vsel %vm220, %v230, %v205
  %v235 = vsel %vm220, %v231, %v207
  %v236 = vsel %vm220, %v232, %v209
  %v237 = vsel %vm220, %v233, %v211
  %v238 = vld [vmem:[%s3] sm:$0xff]
  %v239 = vld [vmem:[%s3 + $0x8] sm:$0xff]
  %v240 = vld [vmem:[%s3 + $0x10] sm:$0xff]
  %v241 = vld [vmem:[%s3 + $0x18] sm:$0xff]
  %v242 = vld [vmem:[%s3 + $0x20] sm:$0xff]
  %v243 = vld [vmem:[%s3 + $0x28] sm:$0xff]
  %v244 = vld [vmem:[%s3 + $0x30] sm:$0xff]
  %v245 = vld [vmem:[%s3 + $0x38] sm:$0xff]
  %v246 = vld [vmem:[%s3 + $0x40] sm:$0xff]
  %v247 = vld [vmem:[%s3 + $0x48] sm:$0xff]
  %v248 = vld [vmem:[%s3 + $0x50] sm:$0xff]
  %v249 = vld [vmem:[%s3 + $0x58] sm:$0xff]
  %v250 = vld [vmem:[%s3 + $0x60] sm:$0xff]
  %v251 = vld [vmem:[%s3 + $0x68] sm:$0xff]
  %v252 = vld [vmem:[%s3 + $0x70] sm:$0xff]
  %v253 = vld [vmem:[%s3 + $0x78] sm:$0xff]
  %v254 = vld [vmem:[%s3 + $0x80] sm:$0xff]
  %v255 = vld [vmem:[%s3 + $0x88] sm:$0xff]
  %v256 = vld [vmem:[%s3 + $0x90] sm:$0xff]
  %v257 = vld [vmem:[%s3 + $0x98] sm:$0xff]
  %v258 = vld [vmem:[%s3 + $0xa0] sm:$0xff]
  %v259 = vld [vmem:[%s3 + $0xa8] sm:$0xff]
  %v260 = vld [vmem:[%s3 + $0xb0] sm:$0xff]
  %v261 = vld [vmem:[%s3 + $0xb8] sm:$0xff]
  %v262 = vld [vmem:[%s3 + $0xc0] sm:$0xff]
  %v263 = vld [vmem:[%s3 + $0xc8] sm:$0xff]
  %v264 = vld [vmem:[%s3 + $0xd0] sm:$0xff]
  %v265 = vld [vmem:[%s3 + $0xd8] sm:$0xff]
  %v266 = vld [vmem:[%s4] sm:$0x1]
  %v268 = vperm.slane %v266, 0
  %v271 = vsel %vm225, %v234, 0
  %v274 = vsel %vm225, %v235, 0
  %v277 = vsel %vm225, %v236, 0
  %v280 = vsel %vm225, %v237, 0
  %282 = vmatpush.msra.mxu0 %v253
  %283 = vmatpush.msra.mxu0 %v252
  %284 = vmatpush.msra.mxu0 %v251
  %285 = vmatpush.msra.mxu0 %v250
  %286 = vmatpush.msra.mxu0 %v249
  %287 = vmatpush.msra.mxu0 %v248
  %288 = vmatpush.msra.mxu0 %v247
  %289 = vmatpush.msra.mxu0 %v246
  %290 = vmatpush.msra.mxu0 %v245
  %291 = vmatpush.msra.mxu0 %v244
  %292 = vmatpush.msra.mxu0 %v243
  %293 = vmatpush.msra.mxu0 %v242
  %294 = vmatpush.msra.mxu0 %v241
  %295 = vmatpush.msra.mxu0 %v240
  %296 = vmatpush.msra.mxu0 %v239
  %297 = vmatpush.msra.mxu0 %v238
  %298 = vmatmul.f32.gmra.mxu0 %v226
  %v299 = vpop.f32.mrf.mxu0
  %v300 = vadd.f32 %v268, %v299
  %301 = vmatmul.f32.gmra.mxu0 %v227
  %v302 = vpop.f32.mrf.mxu0
  %v303 = vadd.f32 %v268, %v302
  %304 = vmatmul.f32.gmra.mxu0 %v228
  %v305 = vpop.f32.mrf.mxu0
  %v306 = vadd.f32 %v268, %v305
  %307 = vmatmul.f32.gmra.mxu0 %v229
  %v308 = vpop.f32.mrf.mxu0
  %v309 = vadd.f32 %v268, %v308
  %310 = vdwg.mxu0
  %311 = vmatpush.msra.mxu0 0.0
  %312 = vmatpush.msra.mxu0 0.0
  %313 = vmatpush.msra.mxu0 0.0
  %314 = vmatpush.msra.mxu0 0.0
  %315 = vmatpush.msra.mxu0 %v265
  %316 = vmatpush.msra.mxu0 %v264
  %317 = vmatpush.msra.mxu0 %v263
  %318 = vmatpush.msra.mxu0 %v262
  %319 = vmatpush.msra.mxu0 %v261
  %320 = vmatpush.msra.mxu0 %v260
  %321 = vmatpush.msra.mxu0 %v259
  %322 = vmatpush.msra.mxu0 %v258
  %323 = vmatpush.msra.mxu0 %v257
  %324 = vmatpush.msra.mxu0 %v256
  %325 = vmatpush.msra.mxu0 %v255
  %326 = vmatpush.msra.mxu0 %v254
  %327 = vmatmul.f32.gmra.mxu0 %v271
  %v328 = vpop.f32.mrf.mxu0
  %v329 = vadd.f32 %v300, %v328
  %330 = vmatmul.f32.gmra.mxu0 %v274
  %v331 = vpop.f32.mrf.mxu0
  %v332 = vadd.f32 %v303, %v331
  %333 = vmatmul.f32.gmra.mxu0 %v277
  %v334 = vpop.f32.mrf.mxu0
  %v335 = vadd.f32 %v306, %v334
  %336 = vmatmul.f32.gmra.mxu0 %v280
  %v337 = vpop.f32.mrf.mxu0
  %v338 = vadd.f32 %v309, %v337
  %339 = vdwg.mxu0
  %v340 = vmax.f32 %v329, 0.0
  %v341 = vmax.f32 %v332, 0.0
  %v342 = vmax.f32 %v335, 0.0
  %v343 = vmax.f32 %v338, 0.0
  %v344 = vld [vmem:[%s5] sm:$0x1]
  %v345 = vld [vmem:[#allocation3] sm:$0x1]
  %347 = vset.pattern.permute.xlu0 0
  %348 = vperm.xlu0 %347, %v345
  %v349 = vpop.permute.xlu0 %348
  %v351 = vperm.slane %v349, 0
  %vm352 = vcmask 130048
  %v354 = vsel %vm352, %v344, 0
  %v357 = vsel %vm352, %v340, 0
  %v360 = vsel %vm352, %v341, 0
  %v363 = vsel %vm352, %v342, 0
  %v366 = vsel %vm352, %v343, 0
  %368 = vmatpush.xpose.msra.mxu0 0.0
  %369 = vmatpush.xpose.msra.mxu0 0.0
  %370 = vmatpush.xpose.msra.mxu0 0.0
  %371 = vmatpush.xpose.msra.mxu0 0.0
  %372 = vmatpush.xpose.msra.mxu0 0.0
  %373 = vmatpush.xpose.msra.mxu0 0.0
  %374 = vmatpush.xpose.msra.mxu0 0.0
  %375 = vmatpush.xpose.msra.mxu0 0.0
  %376 = vmatpush.xpose.msra.mxu0 0.0
  %377 = vmatpush.xpose.msra.mxu0 0.0
  %378 = vmatpush.xpose.msra.mxu0 0.0
  %379 = vmatpush.xpose.msra.mxu0 0.0
  %380 = vmatpush.xpose.msra.mxu0 %v366
  %381 = vmatpush.xpose.msra.mxu0 %v363
  %382 = vmatpush.xpose.msra.mxu0 %v360
  %383 = vmatpush.xpose.msra.mxu0 %v357
  %384 = vmatmul.f32.gmra.mxu0 %v354
  %v385 = vpop.f32.mrf.mxu0
  %v386 = vadd.f32 %v351, %v385
  %387 = vdwg.mxu0
  %v388 = vxor.u32 %v386, 2147483648
  %v389 = vmul.f32 %v388, 1.442695
  %v390 = vpow.pop %v389
  %v391 = vadd.f32 %v390, 1.0
  %v392 = vrcp.pop %v391
  %v393 = vmul.f32 %v391, %v392
  %v394 = vsub.f32 1.0, %v393
  %v395 = vmul.f32 %v392, %v394
  %v396 = vadd.f32 %v392, %v395
  %vm397 = vweird.f32 %v391
  %vm398 = vweird.f32 %v392
  %vm399 = vmor %vm397, %vm398
  %v400 = vsel %vm399, %v392, %v396
  %v401 = vand.u32 2147483647, %v391
  %vm402 = vcmp.eq.f32.partialorder %v401, 8.507059e+37
  %v403 = vand.u32 %v391, 2147483648
  %v404 = vor.u32 1.1754944e-38, %v403
  %v405 = vsel %vm402, %v404, %v400
  %v406 = vmul.f32 1.0, %v405
  %vm407 = vcmask 253952
  %408 = vst.msk [vmem:[%s7] sm:$0x1] %vm407, %v406
  // Predicated region
  $region30: #{model_forward.1} parent=0 // pred_check
    _
  $region31: #{model_forward.1} parent=0 // pred_check_branch
    %410 = sbr.rel (0) target = $region33
  $region32: #{model_forward.1} parent=0 // pred_region
    _
  $region33: #{model_forward.1} parent=0 // pred_fallthru
    _
  // Predicated region
  $region34: #{model_forward.1} parent=0 // pred_check
    _
  $region35: #{model_forward.1} parent=0 // pred_check_branch
    %412 = sbr.rel (0) target = $region37
  $region36: #{model_forward.1} parent=0 // pred_region
    _
  $region37: #{model_forward.1} parent=0 // pred_fallthru
    _

</llo_original>
